<compile_context>
chip_gen: v5e
topology: v5e:2x2
jax: 0.10.0
libtpu: 0.0.40
codegen_flags: <defaults>
</compile_context>

<pallas_src>
import functools

import jax
import jax.numpy as jnp
from jax.experimental import pallas as pl
from jax.experimental.pallas import tpu as pltpu


_MASK_VALUE = -1.0e30            # large finite negative instead of -inf


def _vmem_capacity_bytes():
    """Per-core VMEM capacity; conservative fallback if query unavailable."""
    try:
        info = pltpu.get_tpu_info()
        cap = getattr(info, "vmem_capacity_bytes", None)
        if cap:
            return int(cap)
    except Exception:
        pass
    return 64 * 1024 * 1024      # v7x per-TC size: safe lower bound


def _sdpa_kernel(*refs, inv_temp, has_mask, emit_attn, compute_dtype):
    """refs: q, k, v, [mask], out, [attn].

    q: (BBLK,TQ,D)  k: (BBLK,Lk,D)  v: (BBLK,Lk,Dv)  mask: (BBLK,TQ,Lk) int8.
    """
    it = iter(refs)
    q_ref = next(it)
    k_ref = next(it)
    v_ref = next(it)
    m_ref = next(it) if has_mask else None
    out_ref = next(it)
    attn_ref = next(it) if emit_attn else None

    # Fold 1/temperature into q: TQ*D multiplies instead of TQ*Lk on scores.
    q = q_ref[...] * jnp.asarray(inv_temp, dtype=q_ref.dtype)
    k = k_ref[...]
    if compute_dtype is not None:
        q = q.astype(compute_dtype)
        k = k.astype(compute_dtype)

    # scores = (q/temperature) @ k^T -- contract on D directly (no explicit k.T).
    scores = jnp.einsum("bqd,bkd->bqk", q, k, preferred_element_type=jnp.float32)

    if m_ref is not None:
        scores = jnp.where(m_ref[...] != 0, _MASK_VALUE, scores)

    # Row softmax (dim=2 in the PyTorch module).
    row_max = jnp.max(scores, axis=-1, keepdims=True)
    exps = jnp.exp(scores - row_max)
    denom = jnp.sum(exps, axis=-1, keepdims=True)
    # EUP reciprocal + one Newton step: no per-element divide, ~f32 precision.
    inv = pl.reciprocal(denom, approx=True)
    inv = inv * (2.0 - denom * inv)
    attn = exps * inv

    v = v_ref[...]
    p_dtype = compute_dtype if compute_dtype is not None else v.dtype
    out = jnp.einsum("bqk,bkd->bqd", attn.astype(p_dtype), v.astype(p_dtype),
                     preferred_element_type=jnp.float32)

    if attn_ref is not None:
        attn_ref[...] = attn.astype(attn_ref.dtype)
    out_ref[...] = out.astype(out_ref.dtype)


def _choose_tiles(B, Lq, Lk, D, Dv, elem_bytes, mask_bytes, attn_bytes,
                  emit_attn, budget, block_q=None):
    """Pick (BBLK, TQ) so live VMEM (double-buffered blocks + f32 temps) fits."""
    sub = 16 if elem_bytes == 2 else 8          # sublane packing for bf16 vs f32
    tq_max = 512 if budget >= 64 * 1024 * 1024 else 256

    if block_q is not None:
        tq = max(sub, ((min(block_q, Lq) + sub - 1) // sub) * sub)
    elif Lq <= tq_max:
        tq = Lq                                  # full-extent q block, no tiling
    else:
        tq = tq_max

    def vmem_est(bblk, t):
        q_b = 2 * bblk * t * D * elem_bytes                       # double-buffered
        m_b = 2 * bblk * t * Lk * mask_bytes
        o_b = 2 * bblk * t * Dv * elem_bytes
        a_b = (2 * bblk * t * Lk * attn_bytes) if emit_attn else 0
        kv_b = 2 * bblk * Lk * (D + Dv) * elem_bytes              # resident across qi
        tmp = bblk * t * (3 * Lk + Dv) * 4                        # f32 scores/exps/attn + out
        return q_b + m_b + o_b + a_b + kv_b + tmp

    # Budget-driven batch block: largest divisor of B that fits (may be B).
    bblk = 1
    for d in range(1, B + 1):
        if B % d == 0 and vmem_est(d, tq) <= budget:
            bblk = d
    # If even BBLK=1 is over budget, shrink the q tile (keep sublane-aligned).
    while vmem_est(bblk, tq) > budget and tq > sub:
        tq = max(sub, ((tq // 2 + sub - 1) // sub) * sub)
    return bblk, tq


def scaled_dot_product_attention(q, k, v, temperature, mask=None, *,
                                 attn_dtype=None, return_attn=True,
                                 compute_dtype=None, block_q=None):
    """q: (B, Lq, D), k: (B, Lk, D), v: (B, Lk, Dv), mask: (B, Lq, Lk) bool/int or None.

    Returns (out, attn); attn is None when return_attn=False.
    """
    B, Lq, D = q.shape
    _, Lk, _ = k.shape
    Dv = v.shape[-1]
    out_dtype = q.dtype
    attn_dtype = jnp.dtype(q.dtype) if attn_dtype is None else jnp.dtype(attn_dtype)

    elem_bytes = jnp.dtype(q.dtype).itemsize
    attn_bytes = attn_dtype.itemsize
    mask_bytes = 1 if mask is not None else 0

    # Generation-aware VMEM budget (128 MiB on v5e/v6e, 64 MiB per-TC on v7x).
    vmem_cap = _vmem_capacity_bytes()
    budget = int(vmem_cap * 0.70)
    vmem_limit = int(vmem_cap * 0.80)

    BBLK, TQ = _choose_tiles(B, Lq, Lk, D, Dv, elem_bytes, mask_bytes,
                             attn_bytes, return_attn, budget, block_q)

    # Ragged last q-tile handled by Pallas (masked edge stores) -- no wrapper pad.
    grid = (B // BBLK, pl.cdiv(Lq, TQ))

    in_specs = [
        pl.BlockSpec((BBLK, TQ, D), lambda bi, qi: (bi, qi, 0)),
        # k/v ignore the q-tile index -> VMEM-resident across the inner qi axis.
        pl.BlockSpec((BBLK, Lk, D), lambda bi, qi: (bi, 0, 0)),
        pl.BlockSpec((BBLK, Lk, Dv), lambda bi, qi: (bi, 0, 0)),
    ]
    args = [q, k, v]

    if mask is not None:
        args.append(mask.astype(jnp.int8))   # int8 stream: 4x less mask bandwidth
        in_specs.append(pl.BlockSpec((BBLK, TQ, Lk), lambda bi, qi: (bi, qi, 0)))

    out_specs = [pl.BlockSpec((BBLK, TQ, Dv), lambda bi, qi: (bi, qi, 0))]
    out_shapes = [jax.ShapeDtypeStruct((B, Lq, Dv), out_dtype)]
    if return_attn:
        out_specs.append(pl.BlockSpec((BBLK, TQ, Lk), lambda bi, qi: (bi, qi, 0)))
        out_shapes.append(jax.ShapeDtypeStruct((B, Lq, Lk), attn_dtype))

    kernel = functools.partial(
        _sdpa_kernel,
        inv_temp=1.0 / float(temperature),
        has_mask=mask is not None,
        emit_attn=return_attn,
        compute_dtype=None if compute_dtype is None else jnp.dtype(compute_dtype),
    )

    results = pl.pallas_call(
        kernel,
        out_shape=tuple(out_shapes),
        grid_spec=pltpu.PrefetchScalarGridSpec(
            num_scalar_prefetch=0,
            grid=grid,
            in_specs=in_specs,
            out_specs=out_specs,
        ),
        compiler_params=pltpu.CompilerParams(
            # Batch axis "parallel" (megacore shards it, keeping per-core k/v
            # residency across qi); inner q-tile axis "arbitrary".
            dimension_semantics=("parallel", "arbitrary"),
            vmem_limit_bytes=vmem_limit,
        ),
    )(*args)

    out = results[0]
    attn = results[1] if return_attn else None
    return out, attn


def _reference(q, k, v, temperature, mask=None):
    attn = jnp.einsum("bqd,bkd->bqk", q, k) / temperature
    if mask is not None:
        attn = jnp.where(mask, -jnp.inf, attn)
    attn = jax.nn.softmax(attn, axis=2)
    out = jnp.einsum("bqk,bkd->bqd", attn, v)
    return out, attn


def _check(q, k, v, temperature, mask, **kwargs):
    out, attn = scaled_dot_product_attention(q, k, v, temperature, mask, **kwargs)
    jax.block_until_ready((out, attn))
    out_ref, attn_ref = _reference(q, k, v, temperature, mask)
    assert jnp.allclose(out, out_ref, atol=1e-5, rtol=1e-5), "output mismatch"
    assert jnp.allclose(attn, attn_ref, atol=1e-5, rtol=1e-5), "attn mismatch"


if __name__ == "__main__":
    key = jax.random.PRNGKey(0)
    kq, kk, kv, km = jax.random.split(key, 4)

    # Case 1: small FastSpeech-like shapes, with mask.
    B, Lq, Lk, D, Dv = 2, 8, 8, 32, 32
    temperature = float(D) ** 0.5
    q = jax.random.normal(kq, (B, Lq, D), dtype=jnp.float32)
    k = jax.random.normal(kk, (B, Lk, D), dtype=jnp.float32)
    v = jax.random.normal(kv, (B, Lk, Dv), dtype=jnp.float32)
    mask = jax.random.bernoulli(km, p=0.2, shape=(B, Lq, Lk))
    mask = mask & (jnp.arange(Lk)[None, None, :] > 0)  # keep column 0 unmasked
    _check(q, k, v, temperature, mask)

    # Case 2: mask=None path (dedicated kernel variant, no mask HBM stream).
    _check(q, k, v, temperature, None)

    # Case 3: odd, non-aligned shapes (rectangular k/v, BBLK=whole batch).
    B3, Lq3, Lk3, D3, Dv3 = 3, 40, 24, 32, 48
    k3q, k3k, k3v, k3m = jax.random.split(jax.random.PRNGKey(1), 4)
    q3 = jax.random.normal(k3q, (B3, Lq3, D3), dtype=jnp.float32)
    k3 = jax.random.normal(k3k, (B3, Lk3, D3), dtype=jnp.float32)
    v3 = jax.random.normal(k3v, (B3, Lk3, Dv3), dtype=jnp.float32)
    m3 = jax.random.bernoulli(k3m, p=0.2, shape=(B3, Lq3, Lk3))
    m3 = m3 & (jnp.arange(Lk3)[None, None, :] > 0)
    _check(q3, k3, v3, float(D3) ** 0.5, m3)

    # Case 4: force q tiling with a ragged last tile (block_q=16, Lq=40) to
    # exercise the no-pad / masked-edge-store path.
    _check(q3, k3, v3, float(D3) ** 0.5, m3, block_q=16)

    # Case 5: out-only variant (attn writeback skipped entirely).
    out_only, attn_none = scaled_dot_product_attention(
        q, k, v, temperature, mask, return_attn=False)
    jax.block_until_ready(out_only)
    out_ref, _ = _reference(q, k, v, temperature, mask)
    assert attn_none is None
    assert jnp.allclose(out_only, out_ref, atol=1e-5, rtol=1e-5), "out-only mismatch"

    print("KERNEL_OK")
</pallas_src>

<mosaic_0001>
module attributes {stable_mosaic.version = 11 : i64} {
  func.func @_sdpa_kernel(%arg0: i32, %arg1: i32, %arg2: memref<2x8x32xf32, #tpu.memory_space<vmem>>, %arg3: memref<2x8x32xf32, #tpu.memory_space<vmem>>, %arg4: memref<2x8x32xf32, #tpu.memory_space<vmem>>, %arg5: memref<2x8x8xi8, #tpu.memory_space<vmem>>, %arg6: memref<2x8x32xf32, #tpu.memory_space<vmem>>, %arg7: memref<2x8x8xf32, #tpu.memory_space<vmem>>) attributes {dimension_semantics = [#tpu.dimension_semantics<parallel>, #tpu.dimension_semantics<arbitrary>], iteration_bounds = array<i64: 1, 1>, scalar_prefetch = 0 : i64, scratch_operands = 0 : i64, tpu.core_type = #tpu.core_type<tc>, window_params = [{transform_indices = @transform_0, window_bounds = array<i64: 2, 8, 32>}, {transform_indices = @transform_1, window_bounds = array<i64: 2, 8, 32>}, {transform_indices = @transform_2, window_bounds = array<i64: 2, 8, 32>}, {transform_indices = @transform_3, window_bounds = array<i64: 2, 8, 8>}, {transform_indices = @transform_4, window_bounds = array<i64: 2, 8, 32>}, {transform_indices = @transform_5, window_bounds = array<i64: 2, 8, 8>}]} {
    %c0 = arith.constant 0 : index
    %c0_0 = arith.constant 0 : index
    %c0_1 = arith.constant 0 : index
    %0 = vector.load %arg2[%c0, %c0_0, %c0_1] : memref<2x8x32xf32, #tpu.memory_space<vmem>>, vector<2x8x32xf32>
    %cst = arith.constant 0.176776692 : f32
    %1 = vector.broadcast %cst : f32 to vector<2x8x32xf32>
    %2 = arith.mulf %0, %1 : vector<2x8x32xf32>
    %c0_2 = arith.constant 0 : index
    %c0_3 = arith.constant 0 : index
    %c0_4 = arith.constant 0 : index
    %3 = vector.load %arg3[%c0_2, %c0_3, %c0_4] : memref<2x8x32xf32, #tpu.memory_space<vmem>>, vector<2x8x32xf32>
    "tpu.trace_start"() <{level = 10 : i32, message = "bqd,bkd->bqk"}> : () -> ()
    %cst_5 = arith.constant dense<0.000000e+00> : vector<2x8x8xf32>
    %4 = tpu.matmul %2, %3, %cst_5 {dimension_numbers = #tpu.dot_dimension_numbers<[2], [2], [1], [1], [0, 0, 0, 1, 1, 1], [0], [0]>} : vector<2x8x32xf32>, vector<2x8x32xf32>, vector<2x8x8xf32> -> vector<2x8x8xf32>
    "tpu.trace_stop"() : () -> ()
    %c0_6 = arith.constant 0 : index
    %c0_7 = arith.constant 0 : index
    %c0_8 = arith.constant 0 : index
    %5 = vector.load %arg5[%c0_6, %c0_7, %c0_8] : memref<2x8x8xi8, #tpu.memory_space<vmem>>, vector<2x8x8xi8>
    %c0_i8 = arith.constant 0 : i8
    %6 = vector.broadcast %c0_i8 : i8 to vector<2x8x8xi8>
    %7 = arith.cmpi ne, %5, %6 : vector<2x8x8xi8>
    %cst_9 = arith.constant -1.000000e+30 : f32
    %8 = vector.broadcast %cst_9 : f32 to vector<2x8x8xf32>
    %9 = arith.select %7, %8, %4 : vector<2x8x8xi1>, vector<2x8x8xf32>
    %cst_10 = arith.constant dense<0xFF800000> : vector<2x8xf32>
    %10 = vector.multi_reduction <maximumf>, %9, %cst_10 [2] : vector<2x8x8xf32> to vector<2x8xf32>
    %11 = vector.shape_cast %10 : vector<2x8xf32> to vector<2x8x1xf32>
    %12 = vector.broadcast %11 : vector<2x8x1xf32> to vector<2x8x8xf32>
    %13 = arith.subf %9, %12 : vector<2x8x8xf32>
    %14 = math.exp %13 : vector<2x8x8xf32>
    %cst_11 = arith.constant dense<0.000000e+00> : vector<2x8xf32>
    %15 = vector.multi_reduction <add>, %14, %cst_11 [2] : vector<2x8x8xf32> to vector<2x8xf32>
    %16 = vector.shape_cast %15 : vector<2x8xf32> to vector<2x8x1xf32>
    %17 = tpu.reciprocal %16 {approx = true} : vector<2x8x1xf32> -> vector<2x8x1xf32>
    %18 = arith.mulf %16, %17 : vector<2x8x1xf32>
    %cst_12 = arith.constant 2.000000e+00 : f32
    %19 = vector.broadcast %cst_12 : f32 to vector<2x8x1xf32>
    %20 = arith.subf %19, %18 : vector<2x8x1xf32>
    %21 = arith.mulf %17, %20 : vector<2x8x1xf32>
    %22 = vector.broadcast %21 : vector<2x8x1xf32> to vector<2x8x8xf32>
    %23 = arith.mulf %14, %22 : vector<2x8x8xf32>
    %c0_13 = arith.constant 0 : index
    %c0_14 = arith.constant 0 : index
    %c0_15 = arith.constant 0 : index
    %24 = vector.load %arg4[%c0_13, %c0_14, %c0_15] : memref<2x8x32xf32, #tpu.memory_space<vmem>>, vector<2x8x32xf32>
    "tpu.trace_start"() <{level = 10 : i32, message = "bqk,bkd->bqd"}> : () -> ()
    %cst_16 = arith.constant dense<0.000000e+00> : vector<2x8x32xf32>
    %25 = tpu.matmul %23, %24, %cst_16 {dimension_numbers = #tpu.dot_dimension_numbers<[2], [1], [1], [2], [0, 0, 0, 1, 1, 2], [0], [0]>} : vector<2x8x8xf32>, vector<2x8x32xf32>, vector<2x8x32xf32> -> vector<2x8x32xf32>
    "tpu.trace_stop"() : () -> ()
    %c0_17 = arith.constant 0 : index
    %c0_18 = arith.constant 0 : index
    %c0_19 = arith.constant 0 : index
    %26 = vector.load %arg7[%c0_17, %c0_18, %c0_19] : memref<2x8x8xf32, #tpu.memory_space<vmem>>, vector<2x8x8xf32>
    tpu.vector_store %arg7[%c0_17, %c0_18, %c0_19], %23 {strides = array<i32>} : memref<2x8x8xf32, #tpu.memory_space<vmem>>, vector<2x8x8xf32>,
    %c0_20 = arith.constant 0 : index
    %c0_21 = arith.constant 0 : index
    %c0_22 = arith.constant 0 : index
    %27 = vector.load %arg6[%c0_20, %c0_21, %c0_22] : memref<2x8x32xf32, #tpu.memory_space<vmem>>, vector<2x8x32xf32>
    tpu.vector_store %arg6[%c0_20, %c0_21, %c0_22], %25 {strides = array<i32>} : memref<2x8x32xf32, #tpu.memory_space<vmem>>, vector<2x8x32xf32>,
    return
  }
  func.func @transform_0(%arg0: i32, %arg1: i32) -> (i32, i32, i32) {
    %c0_i32 = arith.constant 0 : i32
    %c0_i32_0 = arith.constant 0 : i32
    return %arg0, %arg1, %c0_i32 : i32, i32, i32
  }
  func.func @transform_1(%arg0: i32, %arg1: i32) -> (i32, i32, i32) {
    %c0_i32 = arith.constant 0 : i32
    %c0_i32_0 = arith.constant 0 : i32
    %c0_i32_1 = arith.constant 0 : i32
    return %arg0, %c0_i32, %c0_i32_0 : i32, i32, i32
  }
  func.func @transform_2(%arg0: i32, %arg1: i32) -> (i32, i32, i32) {
    %c0_i32 = arith.constant 0 : i32
    %c0_i32_0 = arith.constant 0 : i32
    %c0_i32_1 = arith.constant 0 : i32
    return %arg0, %c0_i32, %c0_i32_0 : i32, i32, i32
  }
  func.func @transform_3(%arg0: i32, %arg1: i32) -> (i32, i32, i32) {
    %c0_i32 = arith.constant 0 : i32
    %c0_i32_0 = arith.constant 0 : i32
    return %arg0, %arg1, %c0_i32 : i32, i32, i32
  }
  func.func @transform_4(%arg0: i32, %arg1: i32) -> (i32, i32, i32) {
    %c0_i32 = arith.constant 0 : i32
    %c0_i32_0 = arith.constant 0 : i32
    return %arg0, %arg1, %c0_i32 : i32, i32, i32
  }
  func.func @transform_5(%arg0: i32, %arg1: i32) -> (i32, i32, i32) {
    %c0_i32 = arith.constant 0 : i32
    %c0_i32_0 = arith.constant 0 : i32
    return %arg0, %arg1, %c0_i32 : i32, i32, i32
  }
}

</mosaic_0001>

<llo_original>
// kernel: tpu_custom_call.1
$region0: #{tpu_custom_call.1}
  #allocation0 [shape = 'u32[]', space=smem, size = 0x4, offset = 0x4, fixed_abs, tag = 'smem constant byte address 0x4 - core index']
  #allocation1 [shape = 'u32[72,128]{1,0:T(1,128)}', space=vmem, size = 0x9000, scoped, tag = 'internal scratch']
  %s0 = inlined_call_operand.hbm [shape: f32[2,8,32], index: 0, kind: input, shape index: {}]
  %s1 = inlined_call_operand.hbm [shape: f32[2,8,32], index: 1, kind: input, shape index: {}]
  %s2 = inlined_call_operand.hbm [shape: f32[2,8,32], index: 2, kind: input, shape index: {}]
  %s3 = inlined_call_operand.hbm [shape: s8[2,8,8], index: 3, kind: input, shape index: {}]
  %s4 = inlined_call_operand.hbm [shape: f32[2,8,32], index: 4, kind: output, shape index: {0}]
  %s5 = inlined_call_operand.hbm [shape: f32[2,8,8], index: 5, kind: output, shape index: {1}]
  %6 = xla_tuple %s4, %s5
  %s7 = sld [smem:[#allocation0]]
  $region50: #{tpu_custom_call.1} parent=0
    _
  %s9 = ssub.s32 1, %s7
  %s10 = scalar_select 0, %s9, %s7
  $region1: #{tpu_custom_call.1} parent=0
    #allocation2 [shape = 'u8[8192]{0}', space=vmem, size = 0x2000, scoped, tag = 'input window, operand 0, single buffered']
    #allocation3 [shape = 's32[1]{0}', space=sflag, size = 0x4, scoped, tag = 'scoped memory for tpu_custom_call.1']
    #allocation4 [shape = 's32[1]{0}', space=sflag, size = 0x4, scoped, tag = 'scoped memory for tpu_custom_call.1']
    #allocation5 [shape = 'u8[8192]{0}', space=vmem, size = 0x2000, scoped, tag = 'input window, operand 1, single buffered']
    #allocation6 [shape = 's32[1]{0}', space=sflag, size = 0x4, scoped, tag = 'scoped memory for tpu_custom_call.1']
    #allocation7 [shape = 'u8[8192]{0}', space=vmem, size = 0x2000, scoped, tag = 'input window, operand 2, single buffered']
    #allocation8 [shape = 'u8[2048]{0}', space=vmem, size = 0x800, scoped, tag = 'input window, operand 3, single buffered']
    #allocation9 [shape = 's32[1]{0}', space=sflag, size = 0x4, scoped, tag = 'scoped memory for tpu_custom_call.1']
    #allocation10 [shape = 'u8[8192]{0}', space=vmem, size = 0x2000, scoped, tag = 'output window, operand 0, single buffered']
    #allocation11 [shape = 'u8[8192]{0}', space=vmem, size = 0x2000, scoped, tag = 'output window, operand 1, single buffered']
    #allocation12 [shape = 's32[1]{0}', space=sflag, size = 0x4, scoped, tag = 'scoped memory for tpu_custom_call.1']
    %11 = vsyncpa [#allocation3], 0
    %12 = vsyncpa [#allocation6], 0
    %13 = vsyncpa [#allocation9], 0
    %14 = vsyncpa [#allocation4], 0
    %15 = vsyncpa [#allocation12], 0
    // Predicated region
    $region2: #{tpu_custom_call.1} parent=1 // pred_check
      _
    $region3: #{tpu_custom_call.1} parent=1 // pred_check_branch
      %17 = sbr.rel (0) target = $region5
    $region4: #{tpu_custom_call.1} parent=1 // pred_region
      %19 = vsyncadd [#allocation3], 0
      %s20 = sshll.u32 %s0, 4
      %s21 = int_to_ptr.hbm [resolvable:$true] %s20
      %s22 = sshll.u32 [#allocation2], 4
      %s23 = int_to_ptr.vmem [resolvable:$true] %s22
      %28 = dma.hbm_to_vmem [thread:$0]  %s21, 256, %s23, [#allocation3], 128, 128, 8
    $region5: #{tpu_custom_call.1} parent=1 // pred_fallthru
      _
    // Predicated region
    $region6: #{tpu_custom_call.1} parent=1 // pred_check
      _
    $region7: #{tpu_custom_call.1} parent=1 // pred_check_branch
      %30 = sbr.rel (0) target = $region9
    $region8: #{tpu_custom_call.1} parent=1 // pred_region
      %32 = vsyncadd [#allocation6], 0
      %s33 = sshll.u32 %s1, 4
      %s34 = int_to_ptr.hbm [resolvable:$true] %s33
      %s35 = sshll.u32 [#allocation5], 4
      %s36 = int_to_ptr.vmem [resolvable:$true] %s35
      %41 = dma.hbm_to_vmem [thread:$0]  %s34, 256, %s36, [#allocation6], 128, 128, 8
    $region9: #{tpu_custom_call.1} parent=1 // pred_fallthru
      _
    // Predicated region
    $region10: #{tpu_custom_call.1} parent=1 // pred_check
      _
    $region11: #{tpu_custom_call.1} parent=1 // pred_check_branch
      %43 = sbr.rel (0) target = $region13
    $region12: #{tpu_custom_call.1} parent=1 // pred_region
      %45 = vsyncadd [#allocation6], 0
      %s46 = sshll.u32 %s2, 4
      %s47 = int_to_ptr.hbm [resolvable:$true] %s46
      %s48 = sshll.u32 [#allocation7], 4
      %s49 = int_to_ptr.vmem [resolvable:$true] %s48
      %54 = dma.hbm_to_vmem [thread:$0]  %s47, 256, %s49, [#allocation6], 128, 128, 8
    $region13: #{tpu_custom_call.1} parent=1 // pred_fallthru
      _
    // Predicated region
    $region14: #{tpu_custom_call.1} parent=1 // pred_check
      _
    $region15: #{tpu_custom_call.1} parent=1 // pred_check_branch
      %56 = sbr.rel (0) target = $region17
    $region16: #{tpu_custom_call.1} parent=1 // pred_region
      %58 = vsyncadd [#allocation9], 0
      %s59 = sshll.u32 %s3, 4
      %s60 = int_to_ptr.hbm [resolvable:$true] %s59
      %s61 = sshll.u32 [#allocation8], 4
      %s62 = int_to_ptr.vmem [resolvable:$true] %s61
      %67 = dma.hbm_to_vmem [thread:$0]  %s60, 64, %s62, [#allocation9], 32, 32, 2
    $region17: #{tpu_custom_call.1} parent=1 // pred_fallthru
      _
    // Predicated region
    $region18: #{tpu_custom_call.1} parent=1 // pred_check
      _
    $region19: #{tpu_custom_call.1} parent=1 // pred_check_branch
      %69 = sbr.rel (0) target = $region21
    $region20: #{tpu_custom_call.1} parent=1 // pred_region
      %71 = dma.done [#allocation3], 256
    $region21: #{tpu_custom_call.1} parent=1 // pred_fallthru
      _
    // Predicated region
    $region22: #{tpu_custom_call.1} parent=1 // pred_check
      _
    $region23: #{tpu_custom_call.1} parent=1 // pred_check_branch
      %73 = sbr.rel (0) target = $region25
    $region24: #{tpu_custom_call.1} parent=1 // pred_region
      %75 = dma.done [#allocation6], 256
    $region25: #{tpu_custom_call.1} parent=1 // pred_fallthru
      _
    // Predicated region
    $region26: #{tpu_custom_call.1} parent=1 // pred_check
      _
    $region27: #{tpu_custom_call.1} parent=1 // pred_check_branch
      %77 = sbr.rel (0) target = $region29
    $region28: #{tpu_custom_call.1} parent=1 // pred_region
      %79 = dma.done [#allocation6], 256
    $region29: #{tpu_custom_call.1} parent=1 // pred_fallthru
      _
    // Predicated region
    $region30: #{tpu_custom_call.1} parent=1 // pred_check
      _
    $region31: #{tpu_custom_call.1} parent=1 // pred_check_branch
      %81 = sbr.rel (0) target = $region33
    $region32: #{tpu_custom_call.1} parent=1 // pred_region
      %83 = dma.done [#allocation9], 64
    $region33: #{tpu_custom_call.1} parent=1 // pred_fallthru
      _
    %v86 = vld [vmem:[#allocation2] sm:$0xff]
    %v87 = vld [vmem:[#allocation2 + $0x8] sm:$0xff]
    %v88 = vmul.f32 %v86, 0.17677669
    %v89 = vmul.f32 %v87, 0.17677669
    %v90 = vld [vmem:[#allocation5] sm:$0xff]
    %v91 = vld [vmem:[#allocation5 + $0x8] sm:$0xff]
    %vm92 = vcmask 261120
    %v94 = vsel %vm92, %v88, 0
    %v97 = vsel %vm92, %v90, 0
    %99 = vmatpush.xpose.msra.mxu0 0.0
    %100 = vmatpush.xpose.msra.mxu0 0.0
    %101 = vmatpush.xpose.msra.mxu0 0.0
    %102 = vmatpush.xpose.msra.mxu0 0.0
    %103 = vmatpush.xpose.msra.mxu0 0.0
    %104 = vmatpush.xpose.msra.mxu0 0.0
    %105 = vmatpush.xpose.msra.mxu0 0.0
    %106 = vmatpush.xpose.msra.mxu0 0.0
    %107 = vmatpush.xpose.msra.mxu0 0.0
    %108 = vmatpush.xpose.msra.mxu0 0.0
    %109 = vmatpush.xpose.msra.mxu0 0.0
    %110 = vmatpush.xpose.msra.mxu0 0.0
    %111 = vmatpush.xpose.msra.mxu0 0.0
    %112 = vmatpush.xpose.msra.mxu0 0.0
    %113 = vmatpush.xpose.msra.mxu0 0.0
    %114 = vmatpush.xpose.msra.mxu0 %v97
    %115 = vmatmul.f32.gmra.mxu0 %v94
    %v116 = vpop.f32.mrf.mxu0
    %v117 = vadd.f32 0.0, %v116
    %118 = vdwg.mxu0
    %v120 = vsel %vm92, %v89, 0
    %v123 = vsel %vm92, %v91, 0
    %125 = vmatpush.xpose.msra.mxu0 0.0
    %126 = vmatpush.xpose.msra.mxu0 0.0
    %127 = vmatpush.xpose.msra.mxu0 0.0
    %128 = vmatpush.xpose.msra.mxu0 0.0
    %129 = vmatpush.xpose.msra.mxu0 0.0
    %130 = vmatpush.xpose.msra.mxu0 0.0
    %131 = vmatpush.xpose.msra.mxu0 0.0
    %132 = vmatpush.xpose.msra.mxu0 0.0
    %133 = vmatpush.xpose.msra.mxu0 0.0
    %134 = vmatpush.xpose.msra.mxu0 0.0
    %135 = vmatpush.xpose.msra.mxu0 0.0
    %136 = vmatpush.xpose.msra.mxu0 0.0
    %137 = vmatpush.xpose.msra.mxu0 0.0
    %138 = vmatpush.xpose.msra.mxu0 0.0
    %139 = vmatpush.xpose.msra.mxu0 0.0
    %140 = vmatpush.xpose.msra.mxu0 %v123
    %141 = vmatmul.f32.gmra.mxu0 %v120
    %v142 = vpop.f32.mrf.mxu0
    %v143 = vadd.f32 0.0, %v142
    %144 = vdwg.mxu0
    %v145 = vld [vmem:[#allocation8] sm:$0x3]
    %v146 = vld [vmem:[#allocation8 + $0x2] sm:$0x3]
    %vm147 = vnez %v145
    %vm148 = vnez %v146
    %v149 = vsel %vm147, 16843009, 0
    %v150 = vsel %vm148, 16843009, 0
    %v151 = vunpack.c.0.s8 %v149
    %v152 = vunpack.c.0.s8 %v150
    %vm153 = vcmp.ne.s32.totalorder %v151, 0
    %vm154 = vcmp.ne.s32.totalorder %v152, 0
    %v155 = vsel %vm153, -1e+30, %v117
    %v156 = vsel %vm154, -1e+30, %v143
    %vm157 = vcmask 64512
    %v158 = vsel %vm157, %v155, -inf
    %159 = vmax.xlane.f32.xlu0 %v158
    %v160 = vpop.xlane.xlu0 %159
    %v161 = vsel %vm157, %v156, -inf
    %162 = vmax.xlane.f32.xlu0 %v161
    %v163 = vpop.xlane.xlu0 %162
    %v164 = vsub.f32 %v155, %v160
    %v165 = vsub.f32 %v156, %v163
    %v166 = vmul.f32 %v164, 1.442695
    %v167 = vpow.pop %v166
    %v168 = vmul.f32 %v165, 1.442695
    %v169 = vpow.pop %v168
    %v170 = vsel %vm157, %v167, 0.0
    %171 = vadd.xlane.f32.xlu0 %v170
    %v172 = vpop.xlane.xlu0 %171
    %v173 = vsel %vm157, %v169, 0.0
    %174 = vadd.xlane.f32.xlu0 %v173
    %v175 = vpop.xlane.xlu0 %174
    %v176 = vrcp.pop %v172
    %v177 = vrcp.pop %v175
    %v178 = vmul.f32 %v172, %v176
    %v179 = vmul.f32 %v175, %v177
    %v180 = vsub.f32 2.0, %v178
    %v181 = vsub.f32 2.0, %v179
    %v182 = vmul.f32 %v176, %v180
    %v183 = vmul.f32 %v177, %v181
    %v184 = vmul.f32 %v167, %v182
    %v185 = vmul.f32 %v169, %v183
    %v186 = vld [vmem:[#allocation7] sm:$0xff]
    %v187 = vld [vmem:[#allocation7 + $0x8] sm:$0xff]
    %v189 = vsel %vm157, %v184, 0
    %191 = vmatpush.msra.mxu0 0.0
    %192 = vmatpush.msra.mxu0 0.0
    %193 = vmatpush.msra.mxu0 0.0
    %194 = vmatpush.msra.mxu0 0.0
    %195 = vmatpush.msra.mxu0 0.0
    %196 = vmatpush.msra.mxu0 0.0
    %197 = vmatpush.msra.mxu0 0.0
    %198 = vmatpush.msra.mxu0 0.0
    %199 = vmatpush.msra.mxu0 0.0
    %200 = vmatpush.msra.mxu0 0.0
    %201 = vmatpush.msra.mxu0 0.0
    %202 = vmatpush.msra.mxu0 0.0
    %203 = vmatpush.msra.mxu0 0.0
    %204 = vmatpush.msra.mxu0 0.0
    %205 = vmatpush.msra.mxu0 0.0
    %206 = vmatpush.msra.mxu0 %v186
    %207 = vmatmul.f32.gmra.mxu0 %v189
    %v208 = vpop.f32.mrf.mxu0
    %v209 = vadd.f32 0.0, %v208
    %210 = vdwg.mxu0
    %v212 = vsel %vm157, %v185, 0
    %214 = vmatpush.msra.mxu0 0.0
    %215 = vmatpush.msra.mxu0 0.0
    %216 = vmatpush.msra.mxu0 0.0
    %217 = vmatpush.msra.mxu0 0.0
    %218 = vmatpush.msra.mxu0 0.0
    %219 = vmatpush.msra.mxu0 0.0
    %220 = vmatpush.msra.mxu0 0.0
    %221 = vmatpush.msra.mxu0 0.0
    %222 = vmatpush.msra.mxu0 0.0
    %223 = vmatpush.msra.mxu0 0.0
    %224 = vmatpush.msra.mxu0 0.0
    %225 = vmatpush.msra.mxu0 0.0
    %226 = vmatpush.msra.mxu0 0.0
    %227 = vmatpush.msra.mxu0 0.0
    %228 = vmatpush.msra.mxu0 0.0
    %229 = vmatpush.msra.mxu0 %v187
    %230 = vmatmul.f32.gmra.mxu0 %v212
    %v231 = vpop.f32.mrf.mxu0
    %v232 = vadd.f32 0.0, %v231
    %233 = vdwg.mxu0
    %234 = vst.msk [vmem:[#allocation11] sm:$0xff] %vm157, %v184
    %235 = vst.msk [vmem:[#allocation11 + $0x8] sm:$0xff] %vm157, %v185
    %236 = vst.msk [vmem:[#allocation10] sm:$0xff] %vm92, %v209
    %237 = vst.msk [vmem:[#allocation10 + $0x8] sm:$0xff] %vm92, %v232
    // Predicated region
    $region34: #{tpu_custom_call.1} parent=1 // pred_check
      _
    $region35: #{tpu_custom_call.1} parent=1 // pred_check_branch
      %239 = sbr.rel (0) target = $region37
    $region36: #{tpu_custom_call.1} parent=1 // pred_region
      %241 = vsyncadd [#allocation4], 0
      %s242 = sshll.u32 [#allocation10], 4
      %s243 = int_to_ptr.vmem [resolvable:$true] %s242
      %s244 = sshll.u32 %s4, 4
      %s245 = int_to_ptr.hbm [resolvable:$true] %s244
      %250 = dma.vmem_to_hbm [thread:$0]  %s243, 256, %s245, [#allocation4], 128, 128, 8
    $region37: #{tpu_custom_call.1} parent=1 // pred_fallthru
      _
    // Predicated region
    $region38: #{tpu_custom_call.1} parent=1 // pred_check
      _
    $region39: #{tpu_custom_call.1} parent=1 // pred_check_branch
      %252 = sbr.rel (0) target = $region41
    $region40: #{tpu_custom_call.1} parent=1 // pred_region
      %254 = vsyncadd [#allocation12], 0
      %s255 = sshll.u32 [#allocation11], 4
      %s256 = int_to_ptr.vmem [resolvable:$true] %s255
      %s257 = sshll.u32 %s5, 4
      %s258 = int_to_ptr.hbm [resolvable:$true] %s257
      %263 = dma.vmem_to_hbm [thread:$0]  %s256, 256, %s258, [#allocation12], 128, 128, 8
    $region41: #{tpu_custom_call.1} parent=1 // pred_fallthru
      _
    // Predicated region
    $region42: #{tpu_custom_call.1} parent=1 // pred_check
      _
    $region43: #{tpu_custom_call.1} parent=1 // pred_check_branch
      %265 = sbr.rel (0) target = $region45
    $region44: #{tpu_custom_call.1} parent=1 // pred_region
      %267 = dma.done [#allocation4], 256
    $region45: #{tpu_custom_call.1} parent=1 // pred_fallthru
      _
    // Predicated region
    $region46: #{tpu_custom_call.1} parent=1 // pred_check
      _
    $region47: #{tpu_custom_call.1} parent=1 // pred_check_branch
      %269 = sbr.rel (0) target = $region49
    $region48: #{tpu_custom_call.1} parent=1 // pred_region
      %271 = dma.done [#allocation12], 256
    $region49: #{tpu_custom_call.1} parent=1 // pred_fallthru
      _
    %272 = vsyncpa [#allocation3], 1
    %273 = vsyncpa [#allocation6], 1
    %274 = vsyncpa [#allocation9], 1
    %275 = vsyncpa [#allocation4], 1
    %276 = vsyncpa [#allocation12], 1

</llo_original>
